<compile_context>
chip_gen: v7x
topology: tpu7x:2x2x1
jax: 0.10.0
libtpu: 0.0.40
codegen_flags: <defaults>
</compile_context>

<pallas_src>
import functools

import jax
import jax.numpy as jnp
from jax.experimental import pallas as pl
from jax.experimental.pallas import tpu as pltpu


def _round_up(x, m):
    return ((x + m - 1) // m) * m


# ----------------------------------------------------------------------------
# Pallas kernel: fused  out = sigmoid(x @ Wt)  with full-K resident tiles
# ----------------------------------------------------------------------------
def _proj_sigmoid_kernel(x_ref, w_ref, o_ref):
    # Single MXU matmul over the full (padded) K; f32 accumulation.
    acc = jnp.dot(x_ref[...], w_ref[...], preferred_element_type=jnp.float32)
    # Sigmoid epilogue in f32 (EUP exp + VPU recip), then cast for writeback.
    o_ref[...] = jax.nn.sigmoid(acc).astype(o_ref.dtype)


def _vmem_estimate(tm, tn, kp, cbytes, obytes):
    # double-buffered x block + w block + out block
    return 2 * (tm * kp * cbytes + kp * tn * cbytes + tm * tn * obytes)


@functools.partial(
    jax.jit,
    static_argnames=("tm", "tn", "compute_dtype", "out_dtype", "vmem_limit_bytes"),
)
def projection_sigmoid(
    x,
    w_t,
    *,
    tm=256,
    tn=1024,
    compute_dtype=jnp.bfloat16,
    out_dtype=None,
    vmem_limit_bytes=48 * 1024 * 1024,
):
    """out = sigmoid(x @ w_t).  x: [M, K], w_t: [K, N] -> [M, N] (out_dtype)."""
    M, K = x.shape
    K2, N = w_t.shape
    assert K == K2
    if out_dtype is None:
        out_dtype = x.dtype

    # --- choose tiles (lane/sublane aligned, clamped to VMEM budget) --------
    M8 = _round_up(max(M, 1), 8)
    N128 = _round_up(N, 128)
    K_pad = _round_up(K, 128)          # full K held in one resident tile
    tm = min(tm, M8)                    # both multiples of 8
    tn = min(tn, N128)                  # both multiples of 128

    cbytes = jnp.dtype(compute_dtype).itemsize
    obytes = jnp.dtype(out_dtype).itemsize
    budget = int(0.6 * vmem_limit_bytes)
    while _vmem_estimate(tm, tn, K_pad, cbytes, obytes) > budget and tn > 128:
        tn = max(128, tn // 2)
    while _vmem_estimate(tm, tn, K_pad, cbytes, obytes) > budget and tm > 8:
        tm = max(8, (tm // 2) // 8 * 8)
    # TODO(synk): very large K (>> a few thousand) would need a K-tiled
    # accumulator variant; lm_out_features is small so full-K tiles are fine.

    M_pad = _round_up(M8, tm)
    N_pad = _round_up(N128, tn)

    # --- pad + cast at the boundary -----------------------------------------
    x_p = jnp.pad(x, ((0, M_pad - M), (0, K_pad - K))).astype(compute_dtype)
    w_p = jnp.pad(w_t, ((0, K_pad - K), (0, N_pad - N))).astype(compute_dtype)

    grid = (N_pad // tn, M_pad // tm)   # N-blocks OUTER -> weight stays resident
                                        # while rows stream on the inner axis.

    out_padded = pl.pallas_call(
        _proj_sigmoid_kernel,
        out_shape=jax.ShapeDtypeStruct((M_pad, N_pad), out_dtype),
        grid_spec=pltpu.PrefetchScalarGridSpec(
            num_scalar_prefetch=0,
            grid=grid,
            in_specs=[
                pl.BlockSpec((tm, K_pad), lambda j, i: (i, 0)),   # activations
                pl.BlockSpec((K_pad, tn), lambda j, i: (0, j)),   # weight (resident)
            ],
            out_specs=pl.BlockSpec((tm, tn), lambda j, i: (i, j)),
        ),
        compiler_params=pltpu.CompilerParams(
            # Both axes independent -> shardable across v7x's two TensorCores.
            dimension_semantics=("parallel", "parallel"),
            vmem_limit_bytes=vmem_limit_bytes,
        ),
    )(x_p, w_p)

    return out_padded[:M, :N]


# ----------------------------------------------------------------------------
# Synthetic "language model" stub (glue, plain JAX)
# ----------------------------------------------------------------------------
# TODO(synk): the original `language_model` is an arbitrary external nn.Module
# (e.g. a frozen transformer); stubbed here as embedding lookup + mean pool so
# the whole forward is runnable in-script.
def language_model_stub(token_ids, embed_table):
    tok = jnp.take(embed_table, token_ids, axis=0)   # [N, S, lm_out]
    return jnp.mean(tok, axis=1)                      # [N, lm_out]


# ----------------------------------------------------------------------------
# LMBasedDescriptionEmbedder forward
# ----------------------------------------------------------------------------
def lm_based_description_embedder_forward(token_ids, params):
    # x = language_model(descriptions)
    feats = language_model_stub(token_ids, params["lm_embed_table"])  # [N, lm_out]
    # x = Sigmoid(Linear(lm_out -> emb, bias=False)(x))  (Pallas, fused)
    return projection_sigmoid(feats, params["proj_w_t"])              # [N, emb]


if __name__ == "__main__":
    # Small shapes consistent with the module's forward.
    N_DESC = 8           # number of descriptions (batch)
    SEQ = 8              # tokens per description (LM-internal)
    VOCAB = 50
    LM_OUT = 128         # language_model.out_features
    EMB = 128            # embedding_size

    key = jax.random.PRNGKey(0)
    k_tok, k_tab, k_w = jax.random.split(key, 3)

    token_ids = jax.random.randint(k_tok, (N_DESC, SEQ), 0, VOCAB, dtype=jnp.int32)

    # nn.Linear(in_features=LM_OUT, out_features=EMB, bias=False)
    #   -> torch weight shape [EMB, LM_OUT]; stored pre-transposed as [LM_OUT, EMB].
    lm_embed_table = jax.random.normal(k_tab, (VOCAB, LM_OUT), dtype=jnp.float32)
    proj_w = jax.random.normal(k_w, (EMB, LM_OUT), dtype=jnp.float32) * 0.05
    params = {
        "lm_embed_table": lm_embed_table,
        "proj_w_t": jnp.asarray(proj_w.T),  # [LM_OUT, EMB]
    }

    out = lm_based_description_embedder_forward(token_ids, params)
    out = jax.block_until_ready(out)
    assert out.shape == (N_DESC, EMB)

    # Reference with the same bf16 input cast + f32 accumulation + f32 sigmoid.
    feats_ref = language_model_stub(token_ids, lm_embed_table)
    xb = feats_ref.astype(jnp.bfloat16)
    wb = params["proj_w_t"].astype(jnp.bfloat16)
    ref_bf16 = jax.nn.sigmoid(jnp.dot(xb, wb, preferred_element_type=jnp.float32))
    assert jnp.allclose(out, ref_bf16, atol=2e-3, rtol=2e-3)

    # Looser check against the full-f32 reference (bf16 input quantization only).
    ref_f32 = jax.nn.sigmoid(feats_ref @ proj_w.T)
    assert jnp.allclose(out, ref_f32, atol=5e-2, rtol=5e-2)

    print("KERNEL_OK")
</pallas_src>

<mosaic_0001>
module attributes {stable_mosaic.version = 11 : i64} {
  func.func @_proj_sigmoid_kernel(%arg0: i32, %arg1: i32, %arg2: memref<8x128xbf16, #tpu.memory_space<vmem>>, %arg3: memref<128x128xbf16, #tpu.memory_space<vmem>>, %arg4: memref<8x128xf32, #tpu.memory_space<vmem>>) attributes {dimension_semantics = [#tpu.dimension_semantics<parallel>, #tpu.dimension_semantics<parallel>], iteration_bounds = array<i64: 1, 1>, scalar_prefetch = 0 : i64, scratch_operands = 0 : i64, tpu.core_type = #tpu.core_type<tc>, window_params = [{transform_indices = @transform_0, window_bounds = array<i64: 8, 128>}, {transform_indices = @transform_1, window_bounds = array<i64: 128, 128>}, {transform_indices = @transform_2, window_bounds = array<i64: 8, 128>}]} {
    %c0 = arith.constant 0 : index
    %c0_0 = arith.constant 0 : index
    %0 = vector.load %arg2[%c0, %c0_0] : memref<8x128xbf16, #tpu.memory_space<vmem>>, vector<8x128xbf16>
    %c0_1 = arith.constant 0 : index
    %c0_2 = arith.constant 0 : index
    %1 = vector.load %arg3[%c0_1, %c0_2] : memref<128x128xbf16, #tpu.memory_space<vmem>>, vector<128x128xbf16>
    %cst = arith.constant dense<0.000000e+00> : vector<8x128xf32>
    %2 = tpu.matmul %0, %1, %cst {dimension_numbers = #tpu.dot_dimension_numbers<[1], [0], [0], [1], [0, 0, 1, 1], [], []>} : vector<8x128xbf16>, vector<128x128xbf16>, vector<8x128xf32> -> vector<8x128xf32>
    %3 = arith.negf %2 : vector<8x128xf32>
    %4 = math.exp %3 : vector<8x128xf32>
    %cst_3 = arith.constant 1.000000e+00 : f32
    %5 = vector.broadcast %cst_3 : f32 to vector<8x128xf32>
    %6 = arith.addf %5, %4 : vector<8x128xf32>
    %7 = arith.divf %5, %6 : vector<8x128xf32>
    %c0_4 = arith.constant 0 : index
    %c0_5 = arith.constant 0 : index
    %8 = vector.load %arg4[%c0_4, %c0_5] : memref<8x128xf32, #tpu.memory_space<vmem>>, vector<8x128xf32>
    tpu.vector_store %arg4[%c0_4, %c0_5], %7 {strides = array<i32>} : memref<8x128xf32, #tpu.memory_space<vmem>>, vector<8x128xf32>,
    return
  }
  func.func @transform_0(%arg0: i32, %arg1: i32) -> (i32, i32) {
    %c0_i32 = arith.constant 0 : i32
    %c0_i32_0 = arith.constant 0 : i32
    return %arg1, %c0_i32 : i32, i32
  }
  func.func @transform_1(%arg0: i32, %arg1: i32) -> (i32, i32) {
    %c0_i32 = arith.constant 0 : i32
    %c0_i32_0 = arith.constant 0 : i32
    return %c0_i32, %arg0 : i32, i32
  }
  func.func @transform_2(%arg0: i32, %arg1: i32) -> (i32, i32) {
    %c0_i32 = arith.constant 0 : i32
    return %arg1, %arg0 : i32, i32
  }
}

</mosaic_0001>

<llo_original>
// kernel: projection_sigmoid.1
$region0: #{projection_sigmoid.1}
  #allocation0 [shape = 'u32[]', space=smem, size = 0x4, offset = 0x4, fixed_abs, tag = 'smem constant byte address 0x4 - core index']
  #allocation1 [shape = 'u32[144,128]{1,0:T(1,128)}', space=vmem, size = 0x12000, scoped, tag = 'internal scratch']
  %s0 = inlined_call_operand.vmem [shape: bf16[8,128], index: 0, kind: input, shape index: {}]
  %s1 = inlined_call_operand.vmem [shape: bf16[128,128], index: 1, kind: input, shape index: {}]
  %s2 = inlined_call_operand.hbm [shape: f32[8,128], index: 2, kind: output, shape index: {}]
  %s3 = sld [smem:[#allocation0]]
  $region18: #{projection_sigmoid.1} parent=0
    _
  %s5 = ssub.s32 1, %s3
  %s6 = scalar_select 0, %s5, %s3
  $region1: #{projection_sigmoid.1} parent=0
    #allocation2 [shape = 'u8[4096]{0}', space=vmem, size = 0x1000, scoped, tag = 'output window, operand 0, single buffered']
    #allocation3 [shape = 's32[1]{0}', space=sflag, size = 0x4, scoped, tag = 'scoped memory for projection_sigmoid.1']
    %7 = vsyncpa [#allocation3], 0
    // Predicated region
    $region2: #{projection_sigmoid.1} parent=1 // pred_check
      _
    $region3: #{projection_sigmoid.1} parent=1 // pred_check_branch
      %9 = sbr.rel (0) target = $region5
    $region4: #{projection_sigmoid.1} parent=1 // pred_region
      _
    $region5: #{projection_sigmoid.1} parent=1 // pred_fallthru
      _
    // Predicated region
    $region6: #{projection_sigmoid.1} parent=1 // pred_check
      _
    $region7: #{projection_sigmoid.1} parent=1 // pred_check_branch
      %11 = sbr.rel (0) target = $region9
    $region8: #{projection_sigmoid.1} parent=1 // pred_region
      _
    $region9: #{projection_sigmoid.1} parent=1 // pred_fallthru
      _
    %v13 = vld [vmem:[%s0] sm:$0xf]
    %v14 = vld [vmem:[%s1] sm:$0xf]
    %v15 = vld [vmem:[%s1 + $0x4] sm:$0xf]
    %v16 = vld [vmem:[%s1 + $0x8] sm:$0xf]
    %v17 = vld [vmem:[%s1 + $0xc] sm:$0xf]
    %v18 = vld [vmem:[%s1 + $0x10] sm:$0xf]
    %v19 = vld [vmem:[%s1 + $0x14] sm:$0xf]
    %v20 = vld [vmem:[%s1 + $0x18] sm:$0xf]
    %v21 = vld [vmem:[%s1 + $0x1c] sm:$0xf]
    %v22 = vld [vmem:[%s1 + $0x20] sm:$0xf]
    %v23 = vld [vmem:[%s1 + $0x24] sm:$0xf]
    %v24 = vld [vmem:[%s1 + $0x28] sm:$0xf]
    %v25 = vld [vmem:[%s1 + $0x2c] sm:$0xf]
    %v26 = vld [vmem:[%s1 + $0x30] sm:$0xf]
    %v27 = vld [vmem:[%s1 + $0x34] sm:$0xf]
    %v28 = vld [vmem:[%s1 + $0x38] sm:$0xf]
    %v29 = vld [vmem:[%s1 + $0x3c] sm:$0xf]
    %v46 = vunpack.c.l.b16 %v14
    %v47 = vunpack.c.l.b16 %v15
    %v48 = vunpack.c.l.b16 %v16
    %v49 = vunpack.c.l.b16 %v17
    %v50 = vunpack.c.l.b16 %v18
    %v51 = vunpack.c.l.b16 %v19
    %v52 = vunpack.c.l.b16 %v20
    %v53 = vunpack.c.l.b16 %v21
    %v54 = vunpack.c.l.b16 %v22
    %v55 = vunpack.c.l.b16 %v23
    %v56 = vunpack.c.l.b16 %v24
    %v57 = vunpack.c.l.b16 %v25
    %v58 = vunpack.c.l.b16 %v26
    %v59 = vunpack.c.l.b16 %v27
    %v60 = vunpack.c.l.b16 %v28
    %v61 = vunpack.c.l.b16 %v29
    %v62 = vpack.c.b16 %v47, %v46
    %v63 = vpack.c.b16 %v49, %v48
    %v64 = vpack.c.b16 %v51, %v50
    %v65 = vpack.c.b16 %v53, %v52
    %v66 = vpack.c.b16 %v55, %v54
    %v67 = vpack.c.b16 %v57, %v56
    %v68 = vpack.c.b16 %v59, %v58
    %v69 = vpack.c.b16 %v61, %v60
    %78 = vmatprep.subr.bf16.mxu0 0
    %79 = vmatpush1.bf16.msra.mxu0 %v62
    %80 = vmatprep.subr.bf16.mxu0 0
    %81 = vmatpush1.bf16.msra.mxu0 %v63
    %82 = vmatprep.subr.bf16.mxu0 0
    %83 = vmatpush1.bf16.msra.mxu0 %v64
    %84 = vmatprep.subr.bf16.mxu0 0
    %85 = vmatpush1.bf16.msra.mxu0 %v65
    %86 = vmatprep.subr.bf16.mxu0 0
    %87 = vmatpush1.bf16.msra.mxu0 %v66
    %88 = vmatprep.subr.bf16.mxu0 0
    %89 = vmatpush1.bf16.msra.mxu0 %v67
    %90 = vmatprep.subr.bf16.mxu0 0
    %91 = vmatpush1.bf16.msra.mxu0 %v68
    %92 = vmatprep.subr.bf16.mxu0 0
    %93 = vmatpush1.bf16.msra.mxu0 %v69
    %94 = vmatprep.subr.bf16.mxu0 0
    %95 = vmatpush1.bf16.msra.mxu0 0
    %96 = vmatprep.subr.bf16.mxu0 0
    %97 = vmatpush1.bf16.msra.mxu0 0
    %98 = vmatprep.subr.bf16.mxu0 0
    %99 = vmatpush1.bf16.msra.mxu0 0
    %100 = vmatprep.subr.bf16.mxu0 0
    %101 = vmatpush1.bf16.msra.mxu0 0
    %102 = vmatprep.subr.bf16.mxu0 0
    %103 = vmatpush1.bf16.msra.mxu0 0
    %104 = vmatprep.subr.bf16.mxu0 0
    %105 = vmatpush1.bf16.msra.mxu0 0
    %106 = vmatprep.subr.bf16.mxu0 0
    %107 = vmatpush1.bf16.msra.mxu0 0
    %108 = vmatprep.subr.bf16.mxu0 0
    %109 = vmatpush1.bf16.msra.mxu0 0
    %110 = vmatprep.mubr.bf16.mxu0 0
    %111 = vmatmul.mubr.bf16.gmra.mrb[0].mxu0 %v13
    %v112 = vpop.f32.mrb[0].mxu0
    %v113 = vadd.f32 0.0, %v112
    %v114 = vpop.f32.mrb[0].mxu0
    %v115 = vpop.f32.mrb[0].mxu0
    %v116 = vpop.f32.mrb[0].mxu0
    %117 = vdwg.mxu0
    %v118 = vxor.u32 %v113, 2147483648
    %v119 = vmul.f32 %v118, 1.442695
    %v120 = vpow.pop %v119
    %v121 = vadd.f32 %v120, 1.0
    %v122 = vrcp.pop %v121
    %v123 = vmul.f32 1.0, %v122
    %124 = vst [vmem:[#allocation2] sm:$0xff] %v123
    // Predicated region
    $region10: #{projection_sigmoid.1} parent=1 // pred_check
      _
    $region11: #{projection_sigmoid.1} parent=1 // pred_check_branch
      %126 = sbr.rel (0) target = $region13
    $region12: #{projection_sigmoid.1} parent=1 // pred_region
      %s128 = ssub.s32 128, 128
      %129 = vsyncadd [#allocation3], %s128
      %s131 = sshll.u32 [#allocation2], 4
      %s132 = int_to_ptr.vmem [resolvable:$true] %s131
      %134 = dma.vmem_to_hbm [thread:$0]  %s132, 128, %s2, [#allocation3]
    $region13: #{projection_sigmoid.1} parent=1 // pred_fallthru
      _
    // Predicated region
    $region14: #{projection_sigmoid.1} parent=1 // pred_check
      _
    $region15: #{projection_sigmoid.1} parent=1 // pred_check_branch
      %136 = sbr.rel (0) target = $region17
    $region16: #{projection_sigmoid.1} parent=1 // pred_region
      %137 = dma.done [#allocation3], 128
    $region17: #{projection_sigmoid.1} parent=1 // pred_fallthru
      _
    %138 = vsyncpa [#allocation3], 1

</llo_original>
